<compile_context>
chip_gen: v5e
topology: v5e:2x2
jax: 0.10.0
libtpu: 0.0.40
codegen_flags: <defaults>
</compile_context>

<pallas_src>
import jax
import jax.numpy as jnp
from jax.experimental import pallas as pl
from jax.experimental.pallas import tpu as pltpu

HIDDEN_1 = 64
HIDDEN_2 = 64

_SUBLANE = 8        # vreg sublane width (batch-tile granularity)
_TILE_B_MAX = 4096  # streamed batch tile; x tile <= 4096*37*4 B ~= 0.6 MiB


def _round_up(n, m):
    return ((n + m - 1) // m) * m


def qnetwork_kernel(x_ref, w1_ref, b1_ref, w2_ref, b2_ref, w3_ref, b3_ref, o_ref):
    # fc1 + ReLU (f32 MXU matmul, f32 bias/ReLU on the VPU)
    h1 = jnp.dot(x_ref[...], w1_ref[...], preferred_element_type=jnp.float32)
    h1 = jnp.maximum(h1 + b1_ref[...], 0.0)
    # fc2 + ReLU
    h2 = jnp.dot(h1, w2_ref[...], preferred_element_type=jnp.float32)
    h2 = jnp.maximum(h2 + b2_ref[...], 0.0)
    # fc3 (no activation) -> unpadded (tile_b, A) store
    q = jnp.dot(h2, w3_ref[...], preferred_element_type=jnp.float32)
    o_ref[...] = (q + b3_ref[...]).astype(o_ref.dtype)


@jax.jit
def qnetwork_forward(state, params):
    """Fused QNetwork forward pass.

    state: (B, state_size) float32
    params: dict with w1(in,H1), b1(1,H1), w2(H1,H2), b2(1,H2),
            w3(H2,A), b3(1,A)  (all float32, PyTorch Linear semantics)
    returns: (B, A) float32 q-values
    """
    w1, b1 = params["w1"], params["b1"]
    w2, b2 = params["w2"], params["b2"]
    w3, b3 = params["w3"], params["b3"]

    B, S = state.shape
    H1, H2, A = w1.shape[1], w2.shape[1], w3.shape[1]

    # Batch tiling: large streamed tiles (auto double-buffered by BlockSpec)
    # to amortize per-step overhead, but guarantee >= 2 grid steps whenever B
    # allows so the "parallel" batch axis can be sharded across both v7x TCs.
    half_b = _round_up(pl.cdiv(B, 2), _SUBLANE)
    tile_b = max(_SUBLANE, min(_TILE_B_MAX, half_b))
    grid = (pl.cdiv(B, tile_b),)

    flops = 2 * B * (S * H1 + H1 * H2 + H2 * A)
    bytes_accessed = (
        4 * B * S                             # streamed activations in
        + 4 * B * A                           # streamed q-values out (unpadded)
        + 4 * (S * H1 + H1 * H2 + H2 * A)     # f32 weights (VMEM-resident)
        + 4 * (H1 + H2 + A)                   # f32 biases  (VMEM-resident)
    )

    return pl.pallas_call(
        qnetwork_kernel,
        out_shape=jax.ShapeDtypeStruct((B, A), jnp.float32),
        grid=grid,
        in_specs=[
            pl.BlockSpec((tile_b, S), lambda i: (i, 0)),  # x: streamed over batch
            pl.BlockSpec((S, H1), lambda i: (0, 0)),      # params: constant block
            pl.BlockSpec((1, H1), lambda i: (0, 0)),      #   index -> stay resident
            pl.BlockSpec((H1, H2), lambda i: (0, 0)),     #   in VMEM, no re-DMA
            pl.BlockSpec((1, H2), lambda i: (0, 0)),
            pl.BlockSpec((H2, A), lambda i: (0, 0)),
            pl.BlockSpec((1, A), lambda i: (0, 0)),
        ],
        out_specs=pl.BlockSpec((tile_b, A), lambda i: (i, 0)),
        compiler_params=pltpu.CompilerParams(
            dimension_semantics=("parallel",),  # shard batch tiles across TCs (v7x)
        ),
        cost_estimate=pl.CostEstimate(
            flops=flops, transcendentals=0, bytes_accessed=bytes_accessed),
    )(state, w1, b1, w2, b2, w3, b3)


def init_qnetwork_params(state_size, action_size, seed=0):
    """Deterministic init matching PyTorch nn.Linear default:
    U(-1/sqrt(fan_in), 1/sqrt(fan_in)) for both weight and bias."""
    key = jax.random.PRNGKey(seed)
    ks = jax.random.split(key, 6)

    def linear(kw, kb, fan_in, fan_out):
        bound = 1.0 / jnp.sqrt(jnp.float32(fan_in))
        w = jax.random.uniform(kw, (fan_in, fan_out), jnp.float32, -bound, bound)
        b = jax.random.uniform(kb, (1, fan_out), jnp.float32, -bound, bound)
        return w, b

    w1, b1 = linear(ks[0], ks[1], state_size, HIDDEN_1)
    w2, b2 = linear(ks[2], ks[3], HIDDEN_1, HIDDEN_2)
    w3, b3 = linear(ks[4], ks[5], HIDDEN_2, action_size)
    return {"w1": w1, "b1": b1, "w2": w2, "b2": b2, "w3": w3, "b3": b3}


def qnetwork_reference(state, params):
    """Pure-JAX f32 reference for correctness checking."""
    h1 = jnp.maximum(state @ params["w1"] + params["b1"], 0.0)
    h2 = jnp.maximum(h1 @ params["w2"] + params["b2"], 0.0)
    return h2 @ params["w3"] + params["b3"]


if __name__ == "__main__":
    # Banana-navigation-style sizes.
    state_size = 37
    action_size = 4

    params = init_qnetwork_params(state_size, action_size, seed=0)
    key = jax.random.PRNGKey(0)

    # Small batch (single grid step) and a batch that exercises the
    # multi-step + ragged-last-block path.
    for batch in (8, 200):
        k, key = jax.random.split(key)
        state = jax.random.normal(k, (batch, state_size), dtype=jnp.float32)

        q = qnetwork_forward(state, params)
        jax.block_until_ready(q)

        q_ref = qnetwork_reference(state, params)
        assert q.shape == (batch, action_size)
        # All-f32 path -> tight tolerance vs f32 reference.
        assert jnp.allclose(q, q_ref, atol=1e-4, rtol=1e-5), \
            f"mismatch vs reference at batch={batch}"

    print("KERNEL_OK")
</pallas_src>

<mosaic_0001>
module attributes {stable_mosaic.version = 11 : i64} {
  func.func @qnetwork_kernel(%arg0: i32, %arg1: memref<8x37xf32, #tpu.memory_space<vmem>>, %arg2: memref<37x64xf32, #tpu.memory_space<vmem>>, %arg3: memref<1x64xf32, #tpu.memory_space<vmem>>, %arg4: memref<64x64xf32, #tpu.memory_space<vmem>>, %arg5: memref<1x64xf32, #tpu.memory_space<vmem>>, %arg6: memref<64x4xf32, #tpu.memory_space<vmem>>, %arg7: memref<1x4xf32, #tpu.memory_space<vmem>>, %arg8: memref<8x4xf32, #tpu.memory_space<vmem>>) attributes {dimension_semantics = [#tpu.dimension_semantics<parallel>], iteration_bounds = array<i64: 1>, scalar_prefetch = 0 : i64, scratch_operands = 0 : i64, tpu.core_type = #tpu.core_type<tc>, window_params = [{transform_indices = @transform_0, window_bounds = array<i64: 8, 37>}, {pipeline_mode = #tpu.pipeline_mode<synchronous>, transform_indices = @transform_1, window_bounds = array<i64: 37, 64>}, {pipeline_mode = #tpu.pipeline_mode<synchronous>, transform_indices = @transform_2, window_bounds = array<i64: 1, 64>}, {pipeline_mode = #tpu.pipeline_mode<synchronous>, transform_indices = @transform_3, window_bounds = array<i64: 64, 64>}, {pipeline_mode = #tpu.pipeline_mode<synchronous>, transform_indices = @transform_4, window_bounds = array<i64: 1, 64>}, {pipeline_mode = #tpu.pipeline_mode<synchronous>, transform_indices = @transform_5, window_bounds = array<i64: 64, 4>}, {pipeline_mode = #tpu.pipeline_mode<synchronous>, transform_indices = @transform_6, window_bounds = array<i64: 1, 4>}, {transform_indices = @transform_7, window_bounds = array<i64: 8, 4>}]} {
    %c0 = arith.constant 0 : index
    %c0_0 = arith.constant 0 : index
    %0 = vector.load %arg1[%c0, %c0_0] : memref<8x37xf32, #tpu.memory_space<vmem>>, vector<8x37xf32>
    %c0_1 = arith.constant 0 : index
    %c0_2 = arith.constant 0 : index
    %1 = vector.load %arg2[%c0_1, %c0_2] : memref<37x64xf32, #tpu.memory_space<vmem>>, vector<37x64xf32>
    %cst = arith.constant dense<0.000000e+00> : vector<8x64xf32>
    %2 = tpu.matmul %0, %1, %cst {dimension_numbers = #tpu.dot_dimension_numbers<[1], [0], [0], [1], [0, 0, 1, 1], [], []>} : vector<8x37xf32>, vector<37x64xf32>, vector<8x64xf32> -> vector<8x64xf32>
    %c0_3 = arith.constant 0 : index
    %c0_4 = arith.constant 0 : index
    %3 = vector.load %arg3[%c0_3, %c0_4] : memref<1x64xf32, #tpu.memory_space<vmem>>, vector<1x64xf32>
    %4 = vector.broadcast %3 : vector<1x64xf32> to vector<8x64xf32>
    %5 = arith.addf %2, %4 : vector<8x64xf32>
    %cst_5 = arith.constant 0.000000e+00 : f32
    %6 = vector.broadcast %cst_5 : f32 to vector<8x64xf32>
    %7 = arith.maximumf %5, %6 : vector<8x64xf32>
    %c0_6 = arith.constant 0 : index
    %c0_7 = arith.constant 0 : index
    %8 = vector.load %arg4[%c0_6, %c0_7] : memref<64x64xf32, #tpu.memory_space<vmem>>, vector<64x64xf32>
    %cst_8 = arith.constant dense<0.000000e+00> : vector<8x64xf32>
    %9 = tpu.matmul %7, %8, %cst_8 {dimension_numbers = #tpu.dot_dimension_numbers<[1], [0], [0], [1], [0, 0, 1, 1], [], []>} : vector<8x64xf32>, vector<64x64xf32>, vector<8x64xf32> -> vector<8x64xf32>
    %c0_9 = arith.constant 0 : index
    %c0_10 = arith.constant 0 : index
    %10 = vector.load %arg5[%c0_9, %c0_10] : memref<1x64xf32, #tpu.memory_space<vmem>>, vector<1x64xf32>
    %11 = vector.broadcast %10 : vector<1x64xf32> to vector<8x64xf32>
    %12 = arith.addf %9, %11 : vector<8x64xf32>
    %cst_11 = arith.constant 0.000000e+00 : f32
    %13 = vector.broadcast %cst_11 : f32 to vector<8x64xf32>
    %14 = arith.maximumf %12, %13 : vector<8x64xf32>
    %c0_12 = arith.constant 0 : index
    %c0_13 = arith.constant 0 : index
    %15 = vector.load %arg6[%c0_12, %c0_13] : memref<64x4xf32, #tpu.memory_space<vmem>>, vector<64x4xf32>
    %cst_14 = arith.constant dense<0.000000e+00> : vector<8x4xf32>
    %16 = tpu.matmul %14, %15, %cst_14 {dimension_numbers = #tpu.dot_dimension_numbers<[1], [0], [0], [1], [0, 0, 1, 1], [], []>} : vector<8x64xf32>, vector<64x4xf32>, vector<8x4xf32> -> vector<8x4xf32>
    %c0_15 = arith.constant 0 : index
    %c0_16 = arith.constant 0 : index
    %17 = vector.load %arg7[%c0_15, %c0_16] : memref<1x4xf32, #tpu.memory_space<vmem>>, vector<1x4xf32>
    %18 = vector.broadcast %17 : vector<1x4xf32> to vector<8x4xf32>
    %19 = arith.addf %16, %18 : vector<8x4xf32>
    %c0_17 = arith.constant 0 : index
    %c0_18 = arith.constant 0 : index
    %20 = vector.load %arg8[%c0_17, %c0_18] : memref<8x4xf32, #tpu.memory_space<vmem>>, vector<8x4xf32>
    tpu.vector_store %arg8[%c0_17, %c0_18], %19 {strides = array<i32>} : memref<8x4xf32, #tpu.memory_space<vmem>>, vector<8x4xf32>,
    return
  }
  func.func @transform_0(%arg0: i32) -> (i32, i32) {
    %c0_i32 = arith.constant 0 : i32
    %c0_i32_0 = arith.constant 0 : i32
    return %arg0, %c0_i32 : i32, i32
  }
  func.func @transform_1(%arg0: i32) -> (i32, i32) {
    %c0_i32 = arith.constant 0 : i32
    %c0_i32_0 = arith.constant 0 : i32
    %c0_i32_1 = arith.constant 0 : i32
    return %c0_i32, %c0_i32_0 : i32, i32
  }
  func.func @transform_2(%arg0: i32) -> (i32, i32) {
    %c0_i32 = arith.constant 0 : i32
    %c0_i32_0 = arith.constant 0 : i32
    %c0_i32_1 = arith.constant 0 : i32
    return %c0_i32, %c0_i32_0 : i32, i32
  }
  func.func @transform_3(%arg0: i32) -> (i32, i32) {
    %c0_i32 = arith.constant 0 : i32
    %c0_i32_0 = arith.constant 0 : i32
    %c0_i32_1 = arith.constant 0 : i32
    return %c0_i32, %c0_i32_0 : i32, i32
  }
  func.func @transform_4(%arg0: i32) -> (i32, i32) {
    %c0_i32 = arith.constant 0 : i32
    %c0_i32_0 = arith.constant 0 : i32
    %c0_i32_1 = arith.constant 0 : i32
    return %c0_i32, %c0_i32_0 : i32, i32
  }
  func.func @transform_5(%arg0: i32) -> (i32, i32) {
    %c0_i32 = arith.constant 0 : i32
    %c0_i32_0 = arith.constant 0 : i32
    %c0_i32_1 = arith.constant 0 : i32
    return %c0_i32, %c0_i32_0 : i32, i32
  }
  func.func @transform_6(%arg0: i32) -> (i32, i32) {
    %c0_i32 = arith.constant 0 : i32
    %c0_i32_0 = arith.constant 0 : i32
    %c0_i32_1 = arith.constant 0 : i32
    return %c0_i32, %c0_i32_0 : i32, i32
  }
  func.func @transform_7(%arg0: i32) -> (i32, i32) {
    %c0_i32 = arith.constant 0 : i32
    %c0_i32_0 = arith.constant 0 : i32
    return %arg0, %c0_i32 : i32, i32
  }
}

</mosaic_0001>

<llo_original>
// kernel: qnetwork_forward.1
$region0: #{qnetwork_forward.1}
  #allocation0 [shape = 'u32[]', space=smem, size = 0x4, offset = 0x4, fixed_abs, tag = 'smem constant byte address 0x4 - core index']
  #allocation1 [shape = 'u32[72,128]{1,0:T(1,128)}', space=vmem, size = 0x9000, scoped, tag = 'internal scratch']
  %s0 = inlined_call_operand.vmem [shape: f32[8,37], index: 0, kind: input, shape index: {}]
  %s1 = inlined_call_operand.hbm [shape: f32[37,64], index: 1, kind: input, shape index: {}]
  %s2 = inlined_call_operand.hbm [shape: f32[1,64], index: 2, kind: input, shape index: {}]
  %s3 = inlined_call_operand.vmem [shape: f32[64,64], index: 3, kind: input, shape index: {}]
  %s4 = inlined_call_operand.hbm [shape: f32[1,64], index: 4, kind: input, shape index: {}]
  %s5 = inlined_call_operand.vmem [shape: f32[64,4], index: 5, kind: input, shape index: {}]
  %s6 = inlined_call_operand.hbm [shape: f32[1,4], index: 6, kind: input, shape index: {}]
  %s7 = inlined_call_operand.vmem [shape: f32[8,4], index: 7, kind: output, shape index: {}]
  %s8 = sld [smem:[#allocation0]]
  $region54: #{qnetwork_forward.1} parent=0
    _
  %s10 = ssub.s32 1, %s8
  %s11 = scalar_select 0, %s10, %s8
  $region1: #{qnetwork_forward.1} parent=0
    #allocation2 [shape = 'u8[20480]{0}', space=vmem, size = 0x5000, scoped, tag = 'input window, operand 1, single buffered']
    #allocation3 [shape = 's32[1]{0}', space=sflag, size = 0x4, scoped, tag = 'scoped memory for qnetwork_forward.1']
    #allocation4 [shape = 'u8[512]{0}', space=vmem, size = 0x400, scoped, tag = 'input window, operand 2, single buffered']
    #allocation5 [shape = 's32[1]{0}', space=sflag, size = 0x4, scoped, tag = 'scoped memory for qnetwork_forward.1']
    #allocation6 [shape = 'u8[512]{0}', space=vmem, size = 0x400, scoped, tag = 'input window, operand 4, single buffered']
    #allocation7 [shape = 'u8[512]{0}', space=vmem, size = 0x400, scoped, tag = 'input window, operand 6, single buffered']
    #allocation8 [shape = 's32[1]{0}', space=sflag, size = 0x4, scoped, tag = 'scoped memory for qnetwork_forward.1']
    %12 = vsyncpa [#allocation3], 0
    %13 = vsyncpa [#allocation5], 0
    %14 = vsyncpa [#allocation8], 0
    // Predicated region
    $region2: #{qnetwork_forward.1} parent=1 // pred_check
      _
    $region3: #{qnetwork_forward.1} parent=1 // pred_check_branch
      %16 = sbr.rel (0) target = $region5
    $region4: #{qnetwork_forward.1} parent=1 // pred_region
      _
    $region5: #{qnetwork_forward.1} parent=1 // pred_fallthru
      _
    // Predicated region
    $region6: #{qnetwork_forward.1} parent=1 // pred_check
      _
    $region7: #{qnetwork_forward.1} parent=1 // pred_check_branch
      %18 = sbr.rel (0) target = $region9
    $region8: #{qnetwork_forward.1} parent=1 // pred_region
      %20 = vsyncadd [#allocation3], 0
      %s21 = sshll.u32 %s1, 4
      %s22 = int_to_ptr.hbm [resolvable:$true] %s21
      %s23 = sshll.u32 [#allocation2], 4
      %s24 = int_to_ptr.vmem [resolvable:$true] %s23
      %29 = dma.hbm_to_vmem [thread:$0]  %s22, 640, %s24, [#allocation3], 128, 128, 8
    $region9: #{qnetwork_forward.1} parent=1 // pred_fallthru
      _
    // Predicated region
    $region10: #{qnetwork_forward.1} parent=1 // pred_check
      _
    $region11: #{qnetwork_forward.1} parent=1 // pred_check_branch
      %31 = sbr.rel (0) target = $region13
    $region12: #{qnetwork_forward.1} parent=1 // pred_region
      %33 = vsyncadd [#allocation5], 0
      %s35 = sshll.u32 %s2, 4
      %s36 = int_to_ptr.hbm [resolvable:$true] %s35
      %s37 = sshll.u32 [#allocation4], 4
      %s38 = int_to_ptr.vmem [resolvable:$true] %s37
      %40 = dma.hbm_to_vmem [thread:$0]  %s36, 16, %s38, [#allocation5]
    $region13: #{qnetwork_forward.1} parent=1 // pred_fallthru
      _
    // Predicated region
    $region14: #{qnetwork_forward.1} parent=1 // pred_check
      _
    $region15: #{qnetwork_forward.1} parent=1 // pred_check_branch
      %42 = sbr.rel (0) target = $region17
    $region16: #{qnetwork_forward.1} parent=1 // pred_region
      _
    $region17: #{qnetwork_forward.1} parent=1 // pred_fallthru
      _
    // Predicated region
    $region18: #{qnetwork_forward.1} parent=1 // pred_check
      _
    $region19: #{qnetwork_forward.1} parent=1 // pred_check_branch
      %44 = sbr.rel (0) target = $region21
    $region20: #{qnetwork_forward.1} parent=1 // pred_region
      %46 = vsyncadd [#allocation5], 0
      %s48 = sshll.u32 %s4, 4
      %s49 = int_to_ptr.hbm [resolvable:$true] %s48
      %s50 = sshll.u32 [#allocation6], 4
      %s51 = int_to_ptr.vmem [resolvable:$true] %s50
      %53 = dma.hbm_to_vmem [thread:$0]  %s49, 16, %s51, [#allocation5]
    $region21: #{qnetwork_forward.1} parent=1 // pred_fallthru
      _
    // Predicated region
    $region22: #{qnetwork_forward.1} parent=1 // pred_check
      _
    $region23: #{qnetwork_forward.1} parent=1 // pred_check_branch
      %55 = sbr.rel (0) target = $region25
    $region24: #{qnetwork_forward.1} parent=1 // pred_region
      _
    $region25: #{qnetwork_forward.1} parent=1 // pred_fallthru
      _
    // Predicated region
    $region26: #{qnetwork_forward.1} parent=1 // pred_check
      _
    $region27: #{qnetwork_forward.1} parent=1 // pred_check_branch
      %57 = sbr.rel (0) target = $region29
    $region28: #{qnetwork_forward.1} parent=1 // pred_region
      %59 = vsyncadd [#allocation8], 0
      %s61 = sshll.u32 %s6, 4
      %s62 = int_to_ptr.hbm [resolvable:$true] %s61
      %s63 = sshll.u32 [#allocation7], 4
      %s64 = int_to_ptr.vmem [resolvable:$true] %s63
      %66 = dma.hbm_to_vmem [thread:$0]  %s62, 16, %s64, [#allocation8]
    $region29: #{qnetwork_forward.1} parent=1 // pred_fallthru
      _
    // Predicated region
    $region30: #{qnetwork_forward.1} parent=1 // pred_check
      _
    $region31: #{qnetwork_forward.1} parent=1 // pred_check_branch
      %68 = sbr.rel (0) target = $region33
    $region32: #{qnetwork_forward.1} parent=1 // pred_region
      %70 = dma.done [#allocation3], 640
    $region33: #{qnetwork_forward.1} parent=1 // pred_fallthru
      _
    // Predicated region
    $region34: #{qnetwork_forward.1} parent=1 // pred_check
      _
    $region35: #{qnetwork_forward.1} parent=1 // pred_check_branch
      %72 = sbr.rel (0) target = $region37
    $region36: #{qnetwork_forward.1} parent=1 // pred_region
      %74 = dma.done [#allocation5], 16
    $region37: #{qnetwork_forward.1} parent=1 // pred_fallthru
      _
    // Predicated region
    $region38: #{qnetwork_forward.1} parent=1 // pred_check
      _
    $region39: #{qnetwork_forward.1} parent=1 // pred_check_branch
      %76 = sbr.rel (0) target = $region41
    $region40: #{qnetwork_forward.1} parent=1 // pred_region
      %78 = dma.done [#allocation5], 16
    $region41: #{qnetwork_forward.1} parent=1 // pred_fallthru
      _
    // Predicated region
    $region42: #{qnetwork_forward.1} parent=1 // pred_check
      _
    $region43: #{qnetwork_forward.1} parent=1 // pred_check_branch
      %80 = sbr.rel (0) target = $region45
    $region44: #{qnetwork_forward.1} parent=1 // pred_region
      %82 = dma.done [#allocation8], 16
    $region45: #{qnetwork_forward.1} parent=1 // pred_fallthru
      _
    %v83 = vld [vmem:[%s0] sm:$0xff]
    %v84 = vld [vmem:[#allocation2] sm:$0xff]
    %v85 = vld [vmem:[#allocation2 + $0x8] sm:$0xff]
    %v86 = vld [vmem:[#allocation2 + $0x10] sm:$0xff]
    %v87 = vld [vmem:[#allocation2 + $0x18] sm:$0xff]
    %v88 = vld [vmem:[#allocation2 + $0x20] sm:$0x1f]
    %v89 = vld [vmem:[#allocation4] sm:$0x1]
    %v91 = vperm.slane %v89, 0
    %vm93 = vcmask 302080
    %v95 = vsel %vm93, %v83, 0
    %vm97 = vcmask 1044480
    %v99 = vsel %vm97, %v88, 0
    %101 = vmatpush.msra.mxu0 0.0
    %102 = vmatpush.msra.mxu0 0.0
    %103 = vmatpush.msra.mxu0 0.0
    %104 = vmatpush.msra.mxu0 0.0
    %105 = vmatpush.msra.mxu0 0.0
    %106 = vmatpush.msra.mxu0 0.0
    %107 = vmatpush.msra.mxu0 0.0
    %108 = vmatpush.msra.mxu0 0.0
    %109 = vmatpush.msra.mxu0 0.0
    %110 = vmatpush.msra.mxu0 0.0
    %111 = vmatpush.msra.mxu0 0.0
    %112 = vmatpush.msra.mxu0 %v99
    %113 = vmatpush.msra.mxu0 %v87
    %114 = vmatpush.msra.mxu0 %v86
    %115 = vmatpush.msra.mxu0 %v85
    %116 = vmatpush.msra.mxu0 %v84
    %117 = vmatmul.f32.gmra.mxu0 %v95
    %v118 = vpop.f32.mrf.mxu0
    %v119 = vadd.f32 %v91, %v118
    %120 = vdwg.mxu0
    %v121 = vmax.f32 %v119, 0.0
    %v122 = vld [vmem:[%s3] sm:$0xff]
    %v123 = vld [vmem:[%s3 + $0x8] sm:$0xff]
    %v124 = vld [vmem:[%s3 + $0x10] sm:$0xff]
    %v125 = vld [vmem:[%s3 + $0x18] sm:$0xff]
    %v126 = vld [vmem:[%s3 + $0x20] sm:$0xff]
    %v127 = vld [vmem:[%s3 + $0x28] sm:$0xff]
    %v128 = vld [vmem:[%s3 + $0x30] sm:$0xff]
    %v129 = vld [vmem:[%s3 + $0x38] sm:$0xff]
    %v130 = vld [vmem:[#allocation6] sm:$0x1]
    %v132 = vperm.slane %v130, 0
    %vm134 = vcmask 523264
    %v136 = vsel %vm134, %v121, 0
    %138 = vmatpush.msra.mxu0 0.0
    %139 = vmatpush.msra.mxu0 0.0
    %140 = vmatpush.msra.mxu0 0.0
    %141 = vmatpush.msra.mxu0 0.0
    %142 = vmatpush.msra.mxu0 0.0
    %143 = vmatpush.msra.mxu0 0.0
    %144 = vmatpush.msra.mxu0 0.0
    %145 = vmatpush.msra.mxu0 0.0
    %146 = vmatpush.msra.mxu0 %v129
    %147 = vmatpush.msra.mxu0 %v128
    %148 = vmatpush.msra.mxu0 %v127
    %149 = vmatpush.msra.mxu0 %v126
    %150 = vmatpush.msra.mxu0 %v125
    %151 = vmatpush.msra.mxu0 %v124
    %152 = vmatpush.msra.mxu0 %v123
    %153 = vmatpush.msra.mxu0 %v122
    %154 = vmatmul.f32.gmra.mxu0 %v136
    %v155 = vpop.f32.mrf.mxu0
    %v156 = vadd.f32 %v132, %v155
    %157 = vdwg.mxu0
    %v158 = vmax.f32 %v156, 0.0
    %v159 = vld [vmem:[%s5] sm:$0xff]
    %v160 = vld [vmem:[%s5 + $0x8] sm:$0xff]
    %v161 = vld [vmem:[%s5 + $0x10] sm:$0xff]
    %v162 = vld [vmem:[%s5 + $0x18] sm:$0xff]
    %v163 = vld [vmem:[%s5 + $0x20] sm:$0xff]
    %v164 = vld [vmem:[%s5 + $0x28] sm:$0xff]
    %v165 = vld [vmem:[%s5 + $0x30] sm:$0xff]
    %v166 = vld [vmem:[%s5 + $0x38] sm:$0xff]
    %v167 = vld [vmem:[#allocation7] sm:$0x1]
    %v169 = vperm.slane %v167, 0
    %v172 = vsel %vm134, %v158, 0
    %174 = vmatpush.msra.mxu0 0.0
    %175 = vmatpush.msra.mxu0 0.0
    %176 = vmatpush.msra.mxu0 0.0
    %177 = vmatpush.msra.mxu0 0.0
    %178 = vmatpush.msra.mxu0 0.0
    %179 = vmatpush.msra.mxu0 0.0
    %180 = vmatpush.msra.mxu0 0.0
    %181 = vmatpush.msra.mxu0 0.0
    %182 = vmatpush.msra.mxu0 %v166
    %183 = vmatpush.msra.mxu0 %v165
    %184 = vmatpush.msra.mxu0 %v164
    %185 = vmatpush.msra.mxu0 %v163
    %186 = vmatpush.msra.mxu0 %v162
    %187 = vmatpush.msra.mxu0 %v161
    %188 = vmatpush.msra.mxu0 %v160
    %189 = vmatpush.msra.mxu0 %v159
    %190 = vmatmul.f32.gmra.mxu0 %v172
    %v191 = vpop.f32.mrf.mxu0
    %v192 = vadd.f32 %v169, %v191
    %193 = vdwg.mxu0
    %vm194 = vcmask 31744
    %195 = vst.msk [vmem:[%s7] sm:$0xff] %vm194, %v192
    // Predicated region
    $region46: #{qnetwork_forward.1} parent=1 // pred_check
      _
    $region47: #{qnetwork_forward.1} parent=1 // pred_check_branch
      %197 = sbr.rel (0) target = $region49
    $region48: #{qnetwork_forward.1} parent=1 // pred_region
      _
    $region49: #{qnetwork_forward.1} parent=1 // pred_fallthru
      _
    // Predicated region
    $region50: #{qnetwork_forward.1} parent=1 // pred_check
      _
    $region51: #{qnetwork_forward.1} parent=1 // pred_check_branch
      %199 = sbr.rel (0) target = $region53
    $region52: #{qnetwork_forward.1} parent=1 // pred_region
      _
    $region53: #{qnetwork_forward.1} parent=1 // pred_fallthru
      _
    %200 = vsyncpa [#allocation3], 1
    %201 = vsyncpa [#allocation5], 1
    %202 = vsyncpa [#allocation8], 1

</llo_original>
